<compile_context>
chip_gen: v5e
topology: v5e:2x2
jax: 0.10.0
libtpu: 0.0.40
codegen_flags: <defaults>
</compile_context>

<pallas_src>
import functools

import jax
import jax.numpy as jnp
from jax.experimental import pallas as pl
from jax.experimental.pallas import tpu as pltpu

LANE = 128
_LN2 = 0.6931471805599453


def _logcosh_partial_kernel(t_ref, p_ref, o_ref, *, block_rows, total):
    i = pl.program_id(0)
    last = pl.num_programs(0) - 1

    # Upcast inside the kernel (DMAs stay narrow if inputs are bf16/fp16);
    # all math in f32.
    x = t_ref[...].astype(jnp.float32) - p_ref[...].astype(jnp.float32) + 1e-12

    # Stable log-cosh: |x| + log(1 + exp(-2|x|)) - log(2).
    ax = jnp.abs(x)
    val = ax + jnp.log(1.0 + jnp.exp(-2.0 * ax)) - _LN2

    @pl.when(i != last)
    def _():
        # interior blocks are fully valid: unmasked sublane reduce -> (1, 128)
        o_ref[...] = jnp.sum(val, axis=0, keepdims=True)

    @pl.when(i == last)
    def _():
        # only the last block may contain over-read garbage / padded tail
        row = jax.lax.broadcasted_iota(jnp.int32, val.shape, 0) + i * block_rows
        col = jax.lax.broadcasted_iota(jnp.int32, val.shape, 1)
        valid = row * LANE + col < total
        o_ref[...] = jnp.sum(jnp.where(valid, val, 0.0), axis=0, keepdims=True)


def logcosh_loss(true, pred, *, block_rows=2048):
    """mean(log(cosh(true - pred + 1e-12))) via a Pallas TPU kernel."""
    assert true.shape == pred.shape, "true/pred must have identical shapes"
    total = int(true.size)
    rows = pl.cdiv(total, LANE)

    def as_slab(x):
        flat = x.reshape(-1)
        if total % LANE != 0:
            # Rare fallback: pad only the final partial lane-row (< 128 elems);
            # padded elements are masked out inside the kernel.
            flat = jnp.pad(flat, (0, rows * LANE - total))
        return flat.reshape(rows, LANE)

    t2 = as_slab(true)
    p2 = as_slab(pred)

    # Big lane-dense tiles; clamp for small inputs so the block never exceeds
    # the array (and stays within VMEM on all of v5e/v6e/v7x: <= 4 MB total).
    eff_block_rows = int(min(block_rows, rows))
    num_blocks = pl.cdiv(rows, eff_block_rows)

    kernel = functools.partial(
        _logcosh_partial_kernel, block_rows=eff_block_rows, total=total
    )

    partials = pl.pallas_call(
        kernel,
        out_shape=jax.ShapeDtypeStruct((num_blocks, LANE), jnp.float32),
        grid_spec=pltpu.PrefetchScalarGridSpec(
            num_scalar_prefetch=0,
            grid=(num_blocks,),
            in_specs=[
                pl.BlockSpec((eff_block_rows, LANE), lambda i: (i, 0)),
                pl.BlockSpec((eff_block_rows, LANE), lambda i: (i, 0)),
            ],
            out_specs=pl.BlockSpec((1, LANE), lambda i: (i, 0)),
        ),
        compiler_params=pltpu.CompilerParams(
            dimension_semantics=("parallel",)
        ),
    )(t2, p2)

    # Tiny finishing reduction + mean in plain JAX.
    return jnp.sum(partials) / jnp.float32(total)


if __name__ == "__main__":
    key = jax.random.PRNGKey(0)
    k1, k2 = jax.random.split(key)

    # small NCHW-shaped example inputs (the loss is shape-agnostic)
    shape = (2, 4, 16, 16)
    true = jax.random.normal(k1, shape, dtype=jnp.float32)
    pred = jax.random.normal(k2, shape, dtype=jnp.float32)

    loss = logcosh_loss(true, pred)
    jax.block_until_ready(loss)

    # reference check in plain JAX
    ref = jnp.mean(jnp.log(jnp.cosh((true - pred) + 1e-12)))
    assert jnp.allclose(loss, ref, rtol=1e-5, atol=1e-6), (loss, ref)

    print("KERNEL_OK")
</pallas_src>

<mosaic_0001>
module attributes {stable_mosaic.version = 11 : i64} {
  func.func @_logcosh_partial_kernel(%arg0: i32, %arg1: memref<16x128xf32, #tpu.memory_space<vmem>>, %arg2: memref<16x128xf32, #tpu.memory_space<vmem>>, %arg3: memref<1x128xf32, #tpu.memory_space<vmem>>) attributes {dimension_semantics = [#tpu.dimension_semantics<parallel>], iteration_bounds = array<i64: 1>, scalar_prefetch = 0 : i64, scratch_operands = 0 : i64, tpu.core_type = #tpu.core_type<tc>, window_params = [{transform_indices = @transform_0, window_bounds = array<i64: 16, 128>}, {transform_indices = @transform_1, window_bounds = array<i64: 16, 128>}, {transform_indices = @transform_2, window_bounds = array<i64: 1, 128>}]} {
    %c0 = arith.constant 0 : index
    %c0_0 = arith.constant 0 : index
    %0 = vector.load %arg1[%c0, %c0_0] : memref<16x128xf32, #tpu.memory_space<vmem>>, vector<16x128xf32>
    %c0_1 = arith.constant 0 : index
    %c0_2 = arith.constant 0 : index
    %1 = vector.load %arg2[%c0_1, %c0_2] : memref<16x128xf32, #tpu.memory_space<vmem>>, vector<16x128xf32>
    %2 = arith.subf %0, %1 : vector<16x128xf32>
    %cst = arith.constant 9.99999996E-13 : f32
    %3 = vector.broadcast %cst : f32 to vector<16x128xf32>
    %4 = arith.addf %2, %3 : vector<16x128xf32>
    %5 = math.absf %4 : vector<16x128xf32>
    %cst_3 = arith.constant -2.000000e+00 : f32
    %6 = vector.broadcast %cst_3 : f32 to vector<16x128xf32>
    %7 = arith.mulf %6, %5 : vector<16x128xf32>
    %8 = math.exp %7 : vector<16x128xf32>
    %cst_4 = arith.constant 1.000000e+00 : f32
    %9 = vector.broadcast %cst_4 : f32 to vector<16x128xf32>
    %10 = arith.addf %9, %8 : vector<16x128xf32>
    %11 = math.log %10 : vector<16x128xf32>
    %12 = arith.addf %5, %11 : vector<16x128xf32>
    %cst_5 = arith.constant 0.693147182 : f32
    %13 = vector.broadcast %cst_5 : f32 to vector<16x128xf32>
    %14 = arith.subf %12, %13 : vector<16x128xf32>
    %c0_i32 = arith.constant 0 : i32
    %15 = arith.cmpi ne, %arg0, %c0_i32 : i32
    %16 = arith.extui %15 : i1 to i32
    %c0_i32_6 = arith.constant 0 : i32
    %17 = arith.cmpi ne, %16, %c0_i32_6 : i32
    scf.if %17 {
      %cst_9 = arith.constant dense<0.000000e+00> : vector<128xf32>
      %21 = vector.multi_reduction <add>, %14, %cst_9 [0] : vector<16x128xf32> to vector<128xf32>
      %22 = vector.shape_cast %21 : vector<128xf32> to vector<1x128xf32>
      %c0_10 = arith.constant 0 : index
      %c0_11 = arith.constant 0 : index
      %23 = vector.load %arg3[%c0_10, %c0_11] : memref<1x128xf32, #tpu.memory_space<vmem>>, vector<1x128xf32>
      tpu.vector_store %arg3[%c0_10, %c0_11], %22 {strides = array<i32>} : memref<1x128xf32, #tpu.memory_space<vmem>>, vector<1x128xf32>,
    } else {
    }
    %c0_i32_7 = arith.constant 0 : i32
    %18 = arith.cmpi eq, %arg0, %c0_i32_7 : i32
    %19 = arith.extui %18 : i1 to i32
    %c0_i32_8 = arith.constant 0 : i32
    %20 = arith.cmpi ne, %19, %c0_i32_8 : i32
    scf.if %20 {
      %21 = tpu.iota {dimensions = array<i32: 0>} : vector<16x128xi32>
      %c16_i32 = arith.constant 16 : i32
      %22 = arith.muli %arg0, %c16_i32 : i32
      %23 = vector.broadcast %22 : i32 to vector<16x128xi32>
      %24 = arith.addi %21, %23 : vector<16x128xi32>
      %25 = tpu.iota {dimensions = array<i32: 1>} : vector<16x128xi32>
      %c128_i32 = arith.constant 128 : i32
      %26 = vector.broadcast %c128_i32 : i32 to vector<16x128xi32>
      %27 = arith.muli %24, %26 : vector<16x128xi32>
      %28 = arith.addi %27, %25 : vector<16x128xi32>
      %c2048_i32 = arith.constant 2048 : i32
      %29 = vector.broadcast %c2048_i32 : i32 to vector<16x128xi32>
      %30 = arith.cmpi slt, %28, %29 : vector<16x128xi32>
      %cst_9 = arith.constant 0.000000e+00 : f32
      %31 = vector.broadcast %cst_9 : f32 to vector<16x128xf32>
      %32 = arith.select %30, %14, %31 : vector<16x128xi1>, vector<16x128xf32>
      %cst_10 = arith.constant dense<0.000000e+00> : vector<128xf32>
      %33 = vector.multi_reduction <add>, %32, %cst_10 [0] : vector<16x128xf32> to vector<128xf32>
      %34 = vector.shape_cast %33 : vector<128xf32> to vector<1x128xf32>
      %c0_11 = arith.constant 0 : index
      %c0_12 = arith.constant 0 : index
      %35 = vector.load %arg3[%c0_11, %c0_12] : memref<1x128xf32, #tpu.memory_space<vmem>>, vector<1x128xf32>
      tpu.vector_store %arg3[%c0_11, %c0_12], %34 {strides = array<i32>} : memref<1x128xf32, #tpu.memory_space<vmem>>, vector<1x128xf32>,
    } else {
    }
    return
  }
  func.func @transform_0(%arg0: i32) -> (i32, i32) {
    %c0_i32 = arith.constant 0 : i32
    %c0_i32_0 = arith.constant 0 : i32
    return %arg0, %c0_i32 : i32, i32
  }
  func.func @transform_1(%arg0: i32) -> (i32, i32) {
    %c0_i32 = arith.constant 0 : i32
    %c0_i32_0 = arith.constant 0 : i32
    return %arg0, %c0_i32 : i32, i32
  }
  func.func @transform_2(%arg0: i32) -> (i32, i32) {
    %c0_i32 = arith.constant 0 : i32
    %c0_i32_0 = arith.constant 0 : i32
    return %arg0, %c0_i32 : i32, i32
  }
}

</mosaic_0001>

<llo_original>
// kernel: tpu_custom_call.1
$region0: #{tpu_custom_call.1}
  #allocation0 [shape = 'u32[]', space=smem, size = 0x4, offset = 0x4, fixed_abs, tag = 'smem constant byte address 0x4 - core index']
  #allocation1 [shape = 'u32[72,128]{1,0:T(1,128)}', space=vmem, size = 0x9000, scoped, tag = 'internal scratch']
  %s0 = inlined_call_operand.hbm [shape: f32[16,128], index: 0, kind: input, shape index: {}]
  %s1 = inlined_call_operand.hbm [shape: f32[16,128], index: 1, kind: input, shape index: {}]
  %s2 = inlined_call_operand.hbm [shape: f32[1,128], index: 2, kind: output, shape index: {}]
  %s3 = sld [smem:[#allocation0]]
  $region34: #{tpu_custom_call.1} parent=0
    _
  %s5 = ssub.s32 1, %s3
  %s6 = scalar_select 0, %s5, %s3
  $region1: #{tpu_custom_call.1} parent=0
    #allocation2 [shape = 'u8[8192]{0}', space=vmem, size = 0x2000, scoped, tag = 'input window, operand 0, single buffered']
    #allocation3 [shape = 's32[1]{0}', space=sflag, size = 0x4, scoped, tag = 'scoped memory for tpu_custom_call.1']
    #allocation4 [shape = 's32[1]{0}', space=sflag, size = 0x4, scoped, tag = 'scoped memory for tpu_custom_call.1']
    #allocation5 [shape = 'u8[8192]{0}', space=vmem, size = 0x2000, scoped, tag = 'input window, operand 1, single buffered']
    #allocation6 [shape = 's32[1]{0}', space=sflag, size = 0x4, scoped, tag = 'scoped memory for tpu_custom_call.1']
    #allocation7 [shape = 'u8[512]{0}', space=vmem, size = 0x400, scoped, tag = 'output window, operand 0, single buffered']
    %7 = vsyncpa [#allocation3], 0
    %8 = vsyncpa [#allocation6], 0
    %9 = vsyncpa [#allocation4], 0
    // Predicated region
    $region2: #{tpu_custom_call.1} parent=1 // pred_check
      _
    $region3: #{tpu_custom_call.1} parent=1 // pred_check_branch
      %11 = sbr.rel (0) target = $region5
    $region4: #{tpu_custom_call.1} parent=1 // pred_region
      %13 = vsyncadd [#allocation3], 0
      %s14 = sshll.u32 %s0, 4
      %s15 = int_to_ptr.hbm [resolvable:$true] %s14
      %s16 = sshll.u32 [#allocation2], 4
      %s17 = int_to_ptr.vmem [resolvable:$true] %s16
      %22 = dma.hbm_to_vmem [thread:$0]  %s15, 256, %s17, [#allocation3], 128, 128, 8
    $region5: #{tpu_custom_call.1} parent=1 // pred_fallthru
      _
    // Predicated region
    $region6: #{tpu_custom_call.1} parent=1 // pred_check
      _
    $region7: #{tpu_custom_call.1} parent=1 // pred_check_branch
      %24 = sbr.rel (0) target = $region9
    $region8: #{tpu_custom_call.1} parent=1 // pred_region
      %26 = vsyncadd [#allocation6], 0
      %s27 = sshll.u32 %s1, 4
      %s28 = int_to_ptr.hbm [resolvable:$true] %s27
      %s29 = sshll.u32 [#allocation5], 4
      %s30 = int_to_ptr.vmem [resolvable:$true] %s29
      %35 = dma.hbm_to_vmem [thread:$0]  %s28, 256, %s30, [#allocation6], 128, 128, 8
    $region9: #{tpu_custom_call.1} parent=1 // pred_fallthru
      _
    // Predicated region
    $region10: #{tpu_custom_call.1} parent=1 // pred_check
      _
    $region11: #{tpu_custom_call.1} parent=1 // pred_check_branch
      %37 = sbr.rel (0) target = $region13
    $region12: #{tpu_custom_call.1} parent=1 // pred_region
      %39 = dma.done [#allocation3], 256
    $region13: #{tpu_custom_call.1} parent=1 // pred_fallthru
      _
    // Predicated region
    $region14: #{tpu_custom_call.1} parent=1 // pred_check
      _
    $region15: #{tpu_custom_call.1} parent=1 // pred_check_branch
      %41 = sbr.rel (0) target = $region17
    $region16: #{tpu_custom_call.1} parent=1 // pred_region
      %43 = dma.done [#allocation6], 256
    $region17: #{tpu_custom_call.1} parent=1 // pred_fallthru
      _
    %v44 = vld [vmem:[#allocation2] sm:$0xff]
    %v45 = vld [vmem:[#allocation2 + $0x8] sm:$0xff]
    %v46 = vld [vmem:[#allocation5] sm:$0xff]
    %v47 = vld [vmem:[#allocation5 + $0x8] sm:$0xff]
    %v48 = vsub.f32 %v44, %v46
    %v49 = vsub.f32 %v45, %v47
    %v50 = vadd.f32 %v48, 1e-12
    %v51 = vadd.f32 %v49, 1e-12
    %v52 = vand.u32 2147483647, %v50
    %v53 = vand.u32 2147483647, %v51
    %v54 = vmul.f32 %v52, -2.0
    %v55 = vmul.f32 %v53, -2.0
    %v56 = vmul.f32 %v54, 1.442695
    %v57 = vpow.pop %v56
    %v58 = vmul.f32 %v55, 1.442695
    %v59 = vpow.pop %v58
    %v60 = vadd.f32 %v57, 1.0
    %v61 = vadd.f32 %v59, 1.0
    %v62 = vlog2.pop %v60
    %v63 = vmul.f32 %v62, 0.6931472
    %v64 = vlog2.pop %v61
    %v65 = vmul.f32 %v64, 0.6931472
    %v66 = vadd.f32 %v52, %v63
    %v67 = vadd.f32 %v53, %v65
    %v68 = vsub.f32 %v66, 0.6931472
    %v69 = vsub.f32 %v67, 0.6931472
    %p70 = scmp.ne.s32.totalorder 0, 0
    // Predicated region
    $region18: #{tpu_custom_call.1} parent=1 // pred_check
      %p71 = pneg %p70
    $region19: #{tpu_custom_call.1} parent=1 // pred_check_branch
      %73 = sbr.rel (%p71) target = $region21
    $region20: #{tpu_custom_call.1} parent=1 // pred_region
      %v74 = vadd.f32 %v68, %v69
      %v75 = vrot.slane %v74, 4
      %v76 = vadd.f32 %v74, %v75
      %v77 = vrot.slane %v76, 2
      %v78 = vadd.f32 %v76, %v77
      %v79 = vrot.slane %v78, 1
      %v80 = vadd.f32 %v78, %v79
      %81 = vst [vmem:[#allocation7] sm:$0x1] %v80
    $region21: #{tpu_custom_call.1} parent=1 // pred_fallthru
      _
    %p82 = scmp.eq.s32.totalorder 0, 0
    // Predicated region
    $region22: #{tpu_custom_call.1} parent=1 // pred_check
      %p83 = pneg %p82
    $region23: #{tpu_custom_call.1} parent=1 // pred_check_branch
      %85 = sbr.rel (%p83) target = $region25
    $region24: #{tpu_custom_call.1} parent=1 // pred_region
      %v86 = vlaneseq
      %v87 = vshrl.u32 %v86, 7
      %v88 = vadd.s32 %v87, 8
      %s89 = smul.u32 0, 16
      %v90 = vstv %s89
      %v91 = vadd.s32 %v87, %v90
      %v92 = vadd.s32 %v88, %v90
      %v93 = vlaneseq
      %v94 = vand.u32 %v93, 127
      %v95 = vmul.u32 %v91, 128
      %v96 = vmul.u32 %v92, 128
      %v97 = vadd.s32 %v95, %v94
      %v98 = vadd.s32 %v96, %v94
      %vm99 = vcmp.lt.s32.totalorder %v97, 2048
      %vm100 = vcmp.lt.s32.totalorder %v98, 2048
      %v101 = vsel %vm99, %v68, 0.0
      %v102 = vsel %vm100, %v69, 0.0
      %v103 = vadd.f32 %v101, %v102
      %v104 = vrot.slane %v103, 4
      %v105 = vadd.f32 %v103, %v104
      %v106 = vrot.slane %v105, 2
      %v107 = vadd.f32 %v105, %v106
      %v108 = vrot.slane %v107, 1
      %v109 = vadd.f32 %v107, %v108
      %110 = vst [vmem:[#allocation7] sm:$0x1] %v109
    $region25: #{tpu_custom_call.1} parent=1 // pred_fallthru
      _
    // Predicated region
    $region26: #{tpu_custom_call.1} parent=1 // pred_check
      _
    $region27: #{tpu_custom_call.1} parent=1 // pred_check_branch
      %112 = sbr.rel (0) target = $region29
    $region28: #{tpu_custom_call.1} parent=1 // pred_region
      %114 = vsyncadd [#allocation4], 0
      %s116 = sshll.u32 [#allocation7], 4
      %s117 = int_to_ptr.vmem [resolvable:$true] %s116
      %s118 = sshll.u32 %s2, 4
      %s119 = int_to_ptr.hbm [resolvable:$true] %s118
      %121 = dma.vmem_to_hbm [thread:$0]  %s117, 16, %s119, [#allocation4]
    $region29: #{tpu_custom_call.1} parent=1 // pred_fallthru
      _
    // Predicated region
    $region30: #{tpu_custom_call.1} parent=1 // pred_check
      _
    $region31: #{tpu_custom_call.1} parent=1 // pred_check_branch
      %123 = sbr.rel (0) target = $region33
    $region32: #{tpu_custom_call.1} parent=1 // pred_region
      %125 = dma.done [#allocation4], 16
    $region33: #{tpu_custom_call.1} parent=1 // pred_fallthru
      _
    %126 = vsyncpa [#allocation3], 1
    %127 = vsyncpa [#allocation6], 1
    %128 = vsyncpa [#allocation4], 1

</llo_original>
